<compile_context>
chip_gen: v6e
topology: v6e:2x2x1
jax: 0.10.0
libtpu: 0.0.40
codegen_flags: <defaults>
</compile_context>

<pallas_src>
import functools

import jax
import jax.numpy as jnp
from jax.experimental import pallas as pl
from jax.experimental.pallas import tpu as pltpu


def _round_up(x, m):
    return ((x + m - 1) // m) * m


def _vmem_limit_bytes():
    # Per-generation budget (review: derive from hardware instead of hardcoding).
    try:
        cap = int(getattr(pltpu.get_tpu_info(), "vmem_capacity_bytes",
                          64 * 1024 * 1024))
    except Exception:
        cap = 64 * 1024 * 1024
    return int(min(cap * 3 // 4, 112 * 1024 * 1024))


# --------------------------- pass 1: warp coordinates ---------------------------

def _warp_coords_kernel(H, W,
                        A_ref, b_ref,            # SMEM (3,3), (3,)
                        u_ref, d_ref,            # VMEM (3,TR,128), (TR,128)
                        gx_ref, gy_ref,          # VMEM (TR,128) f32
                        i00_ref, i01_ref, i10_ref, i11_ref,   # VMEM (TR,128) i32
                        w00_ref, w01_ref, w10_ref, w11_ref):  # VMEM (TR,128) f32
    u0 = u_ref[0]
    u1 = u_ref[1]
    u2 = u_ref[2]
    d = d_ref[...]

    hx = d * (A_ref[0, 0] * u0 + A_ref[0, 1] * u1 + A_ref[0, 2] * u2) + b_ref[0]
    hy = d * (A_ref[1, 0] * u0 + A_ref[1, 1] * u1 + A_ref[1, 2] * u2) + b_ref[1]
    hz = d * (A_ref[2, 0] * u0 + A_ref[2, 1] * u1 + A_ref[2, 2] * u2) + b_ref[2]

    # Sign-preserving guard: only pixels numerically on the camera plane are nudged,
    # so near-behind-camera points keep their (mirrored/huge) coordinates like the
    # reference instead of flipping sign.
    tiny = 1e-12
    hz = jnp.where(jnp.abs(hz) < tiny, jnp.where(hz < 0, -tiny, tiny), hz)

    # One EUP reciprocal + 2 Newton steps (~f32 exact) instead of two divides.
    r = pl.reciprocal(hz, approx=True)
    r = r * (2.0 - hz * r)
    r = r * (2.0 - hz * r)

    gx = hx * r * (2.0 / W) - 1.0
    gy = hy * r * (2.0 / H) - 1.0
    gx_ref[...] = gx
    gy_ref[...] = gy

    # grid_sample (bilinear, align_corners=False, padding_mode='zeros')
    xs = (gx + 1.0) * (0.5 * W) - 0.5
    ys = (gy + 1.0) * (0.5 * H) - 0.5
    # keep float->int casts well defined for wild warps; never changes an in-range
    # sample (out-of-range corners get zero weight below anyway)
    xs = jnp.clip(xs, -4.0, W + 4.0)
    ys = jnp.clip(ys, -4.0, H + 4.0)
    x0f = jnp.floor(xs)
    y0f = jnp.floor(ys)
    fx = xs - x0f
    fy = ys - y0f
    x0 = x0f.astype(jnp.int32)
    y0 = y0f.astype(jnp.int32)
    x1 = x0 + 1
    y1 = y0 + 1

    vx0 = (x0 >= 0) & (x0 < W)
    vx1 = (x1 >= 0) & (x1 < W)
    vy0 = (y0 >= 0) & (y0 < H)
    vy1 = (y1 >= 0) & (y1 < H)
    w00_ref[...] = jnp.where(vy0 & vx0, (1.0 - fy) * (1.0 - fx), 0.0)
    w01_ref[...] = jnp.where(vy0 & vx1, (1.0 - fy) * fx, 0.0)
    w10_ref[...] = jnp.where(vy1 & vx0, fy * (1.0 - fx), 0.0)
    w11_ref[...] = jnp.where(vy1 & vx1, fy * fx, 0.0)

    # Pre-clamped flat corner indices (all index arithmetic moved off the pass-2
    # scalar critical path onto the VPU here, per review).
    x0c = jnp.clip(x0, 0, W - 1)
    x1c = jnp.clip(x1, 0, W - 1)
    y0c = jnp.clip(y0, 0, H - 1)
    y1c = jnp.clip(y1, 0, H - 1)
    r0 = y0c * W
    r1 = y1c * W
    i00_ref[...] = r0 + x0c
    i01_ref[...] = r0 + x1c
    i10_ref[...] = r1 + x0c
    i11_ref[...] = r1 + x1c


# --------------------------- pass 2: bilinear gather ----------------------------

def _gather_kernel(TP,
                   i00_ref, i01_ref, i10_ref, i11_ref,     # SMEM (Pp,) i32
                   w00_ref, w01_ref, w10_ref, w11_ref,     # SMEM (Pp,) f32
                   c_ref,                                   # VMEM (P, C) f32
                   out_ref):                                # VMEM (TP, C) f32
    base = pl.program_id(0) * TP

    def body(i, carry):
        p = base + i
        acc = (w00_ref[p] * c_ref[pl.ds(i00_ref[p], 1), :]
               + w01_ref[p] * c_ref[pl.ds(i01_ref[p], 1), :]
               + w10_ref[p] * c_ref[pl.ds(i10_ref[p], 1), :]
               + w11_ref[p] * c_ref[pl.ds(i11_ref[p], 1), :])
        out_ref[pl.ds(i, 1), :] = acc
        return carry

    # unroll=8: batch 8 pixels per loop iteration so the scalar unit is not the
    # per-pixel serializer (review item #1).
    jax.lax.fori_loop(0, TP, body, 0, unroll=8)


# ------------------------------------ wrapper ------------------------------------

class WarpPallas:
    """Pallas TPU port of gslam Warp (forward only)."""

    def __init__(self, K, H, W):
        self.H = int(H)
        self.W = int(W)
        self.K = jnp.asarray(K, jnp.float32)
        Ki = jnp.linalg.inv(self.K)
        # unproj[k, h, w] = (K^-1 [w, h, 1]^T)_k   (pixel-major (h, w) planes)
        wc = jnp.arange(W, dtype=jnp.float32)[None, :]
        hc = jnp.arange(H, dtype=jnp.float32)[:, None]
        ones = jnp.ones((H, W), jnp.float32)
        self.unproj = jnp.stack(
            [Ki[k, 0] * wc + Ki[k, 1] * hc + Ki[k, 2] * ones for k in range(3)],
            axis=0)                                        # (3, H, W)

        # Flatten pixels to rows of 128 lanes.  Pass-1 tile (TR1 rows) is large for
        # HBM-roofline streaming; pass-2 tile (TR2 rows -> 1K pixels) is decoupled
        # and small so its (TP2, C) VMEM block stays tiny on 64 MiB parts (v7x).
        P = self.H * self.W
        rows = pl.cdiv(P, 128)
        if rows <= 8:
            tr2 = rows
            tr1 = rows
            rp = rows
        else:
            tr2 = 8
            base_rows = _round_up(rows, 8)
            tr1 = min(512, base_rows)
            rp = _round_up(base_rows, tr1)
        self._tr1 = tr1
        self._tr2 = tr2
        self._rows_padded = rp
        self._p_padded = rp * 128

        # Pre-pad/flatten the unprojection planes once (no per-call mu/pad copies).
        pad = self._p_padded - P
        u_flat = self.unproj.reshape(3, P)
        if pad:
            u_flat = jnp.concatenate([u_flat, jnp.zeros((3, pad), jnp.float32)], axis=1)
        self._u_flat = u_flat.reshape(3, rp, 128)

        self._vmem_limit = _vmem_limit_bytes()

    def __call__(self, f1_pose, f2_pose, c1, d1):
        H, W = self.H, self.W
        P = H * W
        C = c1.shape[-1]
        TR1, TR2 = self._tr1, self._tr2
        Rp, Pp = self._rows_padded, self._p_padded
        TP2 = TR2 * 128

        # ---- tiny 4x4 / 3x3 pose algebra stays in plain JAX ----
        f1 = jnp.asarray(f1_pose, jnp.float32)
        f2 = jnp.asarray(f2_pose, jnp.float32)
        T = jnp.matmul(f1, jnp.linalg.inv(f2), precision=jax.lax.Precision.HIGHEST)
        R, t = T[:3, :3], T[:3, 3]
        A = (self.K[:, :, None] * R[None, :, :]).sum(axis=1)                # K @ R
        b = (self.K * (1e-10 * R.sum(axis=1) + t)[None, :]).sum(axis=1)     # K(R eps + t)

        pad = Pp - P
        d_flat = d1.reshape(P).astype(jnp.float32)
        if pad:
            d_flat = jnp.concatenate([d_flat, jnp.ones((pad,), jnp.float32)])
        d_flat = d_flat.reshape(Rp, 128)

        smem = pltpu.MemorySpace.SMEM
        cparams = pltpu.CompilerParams(
            dimension_semantics=("parallel",),
            vmem_limit_bytes=self._vmem_limit)

        f32, i32 = jnp.float32, jnp.int32
        row_spec = pl.BlockSpec((TR1, 128), lambda i: (i, 0))
        plane = lambda dt: jax.ShapeDtypeStruct((Rp, 128), dt)

        # ---- pass 1: lane-dense warp coords + flat corner indices + weights ----
        (gx, gy, i00, i01, i10, i11, w00, w01, w10, w11) = pl.pallas_call(
            functools.partial(_warp_coords_kernel, H, W),
            out_shape=(plane(f32), plane(f32),
                       plane(i32), plane(i32), plane(i32), plane(i32),
                       plane(f32), plane(f32), plane(f32), plane(f32)),
            grid=(Rp // TR1,),
            in_specs=[
                pl.BlockSpec(memory_space=smem),                    # A (3,3)
                pl.BlockSpec(memory_space=smem),                    # b (3,)
                pl.BlockSpec((3, TR1, 128), lambda i: (0, i, 0)),   # unproj planes
                row_spec,                                           # depth
            ],
            out_specs=(row_spec,) * 10,
            compiler_params=cparams,
        )(A, b, self._u_flat, d_flat)

        # ---- pass 2: weighted bilinear gather (4 precomputed corners / pixel) ----
        c_flat = c1.reshape(P, C).astype(jnp.float32)
        smem_spec = pl.BlockSpec(memory_space=smem)
        gathered = pl.pallas_call(
            functools.partial(_gather_kernel, TP2),
            out_shape=jax.ShapeDtypeStruct((Pp, C), f32),
            grid=(Rp // TR2,),
            in_specs=[smem_spec] * 8 + [pl.BlockSpec((P, C), lambda i: (0, 0))],
            out_specs=pl.BlockSpec((TP2, C), lambda i: (i, 0)),
            compiler_params=cparams,
        )(i00.reshape(Pp), i01.reshape(Pp), i10.reshape(Pp), i11.reshape(Pp),
          w00.reshape(Pp), w01.reshape(Pp), w10.reshape(Pp), w11.reshape(Pp),
          c_flat)

        result = gathered[:P].reshape(H, W, C)
        gx_hw = gx.reshape(Pp)[:P].reshape(H, W)
        gy_hw = gy.reshape(Pp)[:P].reshape(H, W)
        normalized_warps = jnp.stack([gx_hw, gy_hw], axis=-1)[None]      # (1, H, W, 2)
        keep_mask = ((gx_hw < 1.0) & (gy_hw < 1.0)
                     & (gx_hw > -1.0) & (gy_hw > -1.0))                  # (H, W) bool
        return result, normalized_warps, keep_mask


# ------------------------- pure-JAX reference helpers -------------------------

def _ref_warps(warp, f1_pose, f2_pose, d1):
    H, W = warp.H, warp.W
    P = H * W
    Tm = jnp.matmul(jnp.asarray(f1_pose, jnp.float32),
                    jnp.linalg.inv(jnp.asarray(f2_pose, jnp.float32)),
                    precision=jax.lax.Precision.HIGHEST)
    Rm, t = Tm[:3, :3], Tm[:3, 3]
    K = warp.K
    u0 = warp.unproj[0].reshape(P)
    u1 = warp.unproj[1].reshape(P)
    u2 = warp.unproj[2].reshape(P)
    d = d1.reshape(P).astype(jnp.float32)
    p0 = d * u0 + 1e-10
    p1 = d * u1 + 1e-10
    p2 = d * u2 + 1e-10
    q0 = Rm[0, 0] * p0 + Rm[0, 1] * p1 + Rm[0, 2] * p2 + t[0]
    q1 = Rm[1, 0] * p0 + Rm[1, 1] * p1 + Rm[1, 2] * p2 + t[1]
    q2 = Rm[2, 0] * p0 + Rm[2, 1] * p1 + Rm[2, 2] * p2 + t[2]
    w0 = K[0, 0] * q0 + K[0, 1] * q1 + K[0, 2] * q2
    w1 = K[1, 0] * q0 + K[1, 1] * q1 + K[1, 2] * q2
    w2 = K[2, 0] * q0 + K[2, 1] * q1 + K[2, 2] * q2
    gx = w0 / w2 * (2.0 / W) - 1.0
    gy = w1 / w2 * (2.0 / H) - 1.0
    return gx, gy


def _ref_bilinear(c1, gx, gy, H, W):
    P = H * W
    C = c1.shape[-1]
    c_flat = c1.reshape(P, C)
    xs = (gx + 1.0) * (0.5 * W) - 0.5
    ys = (gy + 1.0) * (0.5 * H) - 0.5
    x0 = jnp.floor(xs).astype(jnp.int32)
    y0 = jnp.floor(ys).astype(jnp.int32)
    fx = xs - x0
    fy = ys - y0

    def samp(yi, xi, wgt):
        valid = (xi >= 0) & (xi < W) & (yi >= 0) & (yi < H)
        idx = jnp.clip(yi * W + xi, 0, P - 1)
        return jnp.where(valid, wgt, 0.0)[:, None] * c_flat[idx]

    out = (samp(y0, x0, (1 - fy) * (1 - fx)) + samp(y0, x0 + 1, (1 - fy) * fx)
           + samp(y0 + 1, x0, fy * (1 - fx)) + samp(y0 + 1, x0 + 1, fy * fx))
    return out.reshape(H, W, C)


if __name__ == "__main__":
    H, W, C = 16, 16, 4
    key = jax.random.PRNGKey(0)
    k_img, k_depth = jax.random.split(key)

    K = jnp.array([[20.0, 0.0, W / 2.0],
                   [0.0, 20.0, H / 2.0],
                   [0.0, 0.0, 1.0]], dtype=jnp.float32)

    def make_pose(rz, ry, trans):
        cz, sz = jnp.cos(rz), jnp.sin(rz)
        cy, sy = jnp.cos(ry), jnp.sin(ry)
        Rz = jnp.array([[cz, -sz, 0.0], [sz, cz, 0.0], [0.0, 0.0, 1.0]], jnp.float32)
        Ry = jnp.array([[cy, 0.0, sy], [0.0, 1.0, 0.0], [-sy, 0.0, cy]], jnp.float32)
        pose = jnp.eye(4, dtype=jnp.float32)
        pose = pose.at[:3, :3].set(Rz @ Ry)
        pose = pose.at[:3, 3].set(jnp.asarray(trans, jnp.float32))
        return pose

    f1_pose = make_pose(0.05, -0.03, [0.10, -0.05, 0.02])
    f2_pose = make_pose(-0.02, 0.04, [-0.06, 0.03, 0.08])
    c1 = jax.random.uniform(k_img, (H, W, C), dtype=jnp.float32)
    d1 = jax.random.uniform(k_depth, (H, W), dtype=jnp.float32, minval=1.0, maxval=3.0)

    warp = WarpPallas(K, H, W)
    result, normalized_warps, keep_mask = warp(f1_pose, f2_pose, c1, d1)
    jax.block_until_ready((result, normalized_warps, keep_mask))

    # --- sanity checks against a pure-JAX reference ---
    gx_ref, gy_ref = _ref_warps(warp, f1_pose, f2_pose, d1)
    warps_ref = jnp.stack([gx_ref.reshape(H, W), gy_ref.reshape(H, W)], -1)[None]
    assert jnp.allclose(normalized_warps, warps_ref, atol=1e-4, rtol=1e-4)

    gx_k = normalized_warps[0, ..., 0].reshape(-1)
    gy_k = normalized_warps[0, ..., 1].reshape(-1)
    result_ref = _ref_bilinear(c1, gx_k, gy_k, H, W)
    assert jnp.allclose(result, result_ref, atol=1e-4, rtol=1e-4)

    keep_ref = ((gx_k < 1.0) & (gy_k < 1.0) & (gx_k > -1.0) & (gy_k > -1.0)).reshape(H, W)
    assert bool(jnp.all(keep_mask == keep_ref))

    print("KERNEL_OK")
</pallas_src>

<mosaic_0001>
module attributes {stable_mosaic.version = 11 : i64} {
  func.func @_warp_coords_kernel(%arg0: i32, %arg1: memref<3x3xf32, #tpu.memory_space<smem>>, %arg2: memref<3xf32, #tpu.memory_space<smem>>, %arg3: memref<3x2x128xf32, #tpu.memory_space<vmem>>, %arg4: memref<2x128xf32, #tpu.memory_space<vmem>>, %arg5: memref<2x128xf32, #tpu.memory_space<vmem>>, %arg6: memref<2x128xf32, #tpu.memory_space<vmem>>, %arg7: memref<2x128xi32, #tpu.memory_space<vmem>>, %arg8: memref<2x128xi32, #tpu.memory_space<vmem>>, %arg9: memref<2x128xi32, #tpu.memory_space<vmem>>, %arg10: memref<2x128xi32, #tpu.memory_space<vmem>>, %arg11: memref<2x128xf32, #tpu.memory_space<vmem>>, %arg12: memref<2x128xf32, #tpu.memory_space<vmem>>, %arg13: memref<2x128xf32, #tpu.memory_space<vmem>>, %arg14: memref<2x128xf32, #tpu.memory_space<vmem>>) attributes {dimension_semantics = [#tpu.dimension_semantics<parallel>], iteration_bounds = array<i64: 1>, scalar_prefetch = 0 : i64, scratch_operands = 0 : i64, tpu.core_type = #tpu.core_type<tc>, window_params = [{transform_indices = @transform_0, window_bounds = array<i64: 3, 3>}, {transform_indices = @transform_1, window_bounds = array<i64: 3>}, {transform_indices = @transform_2, window_bounds = array<i64: 3, 2, 128>}, {transform_indices = @transform_3, window_bounds = array<i64: 2, 128>}, {transform_indices = @transform_4, window_bounds = array<i64: 2, 128>}, {transform_indices = @transform_5, window_bounds = array<i64: 2, 128>}, {transform_indices = @transform_6, window_bounds = array<i64: 2, 128>}, {transform_indices = @transform_7, window_bounds = array<i64: 2, 128>}, {transform_indices = @transform_8, window_bounds = array<i64: 2, 128>}, {transform_indices = @transform_9, window_bounds = array<i64: 2, 128>}, {transform_indices = @transform_10, window_bounds = array<i64: 2, 128>}, {transform_indices = @transform_11, window_bounds = array<i64: 2, 128>}, {transform_indices = @transform_12, window_bounds = array<i64: 2, 128>}, {transform_indices = @transform_13, window_bounds = array<i64: 2, 128>}]} {
    %c0 = arith.constant 0 : index
    %c0_0 = arith.constant 0 : index
    %c0_1 = arith.constant 0 : index
    %0 = vector.load %arg3[%c0, %c0_0, %c0_1] : memref<3x2x128xf32, #tpu.memory_space<vmem>>, vector<1x2x128xf32>
    %1 = vector.shape_cast %0 : vector<1x2x128xf32> to vector<2x128xf32>
    %c1 = arith.constant 1 : index
    %c0_2 = arith.constant 0 : index
    %c0_3 = arith.constant 0 : index
    %2 = vector.load %arg3[%c1, %c0_2, %c0_3] : memref<3x2x128xf32, #tpu.memory_space<vmem>>, vector<1x2x128xf32>
    %3 = vector.shape_cast %2 : vector<1x2x128xf32> to vector<2x128xf32>
    %c2 = arith.constant 2 : index
    %c0_4 = arith.constant 0 : index
    %c0_5 = arith.constant 0 : index
    %4 = vector.load %arg3[%c2, %c0_4, %c0_5] : memref<3x2x128xf32, #tpu.memory_space<vmem>>, vector<1x2x128xf32>
    %5 = vector.shape_cast %4 : vector<1x2x128xf32> to vector<2x128xf32>
    %c0_6 = arith.constant 0 : index
    %c0_7 = arith.constant 0 : index
    %6 = vector.load %arg4[%c0_6, %c0_7] : memref<2x128xf32, #tpu.memory_space<vmem>>, vector<2x128xf32>
    %c0_8 = arith.constant 0 : index
    %c0_9 = arith.constant 0 : index
    %7 = memref.load %arg1[%c0_8, %c0_9] : memref<3x3xf32, #tpu.memory_space<smem>>
    %8 = vector.broadcast %7 : f32 to vector<2x128xf32>
    %9 = arith.mulf %8, %1 : vector<2x128xf32>
    %c0_10 = arith.constant 0 : index
    %c1_11 = arith.constant 1 : index
    %10 = memref.load %arg1[%c0_10, %c1_11] : memref<3x3xf32, #tpu.memory_space<smem>>
    %11 = vector.broadcast %10 : f32 to vector<2x128xf32>
    %12 = arith.mulf %11, %3 : vector<2x128xf32>
    %13 = arith.addf %9, %12 : vector<2x128xf32>
    %c0_12 = arith.constant 0 : index
    %c2_13 = arith.constant 2 : index
    %14 = memref.load %arg1[%c0_12, %c2_13] : memref<3x3xf32, #tpu.memory_space<smem>>
    %15 = vector.broadcast %14 : f32 to vector<2x128xf32>
    %16 = arith.mulf %15, %5 : vector<2x128xf32>
    %17 = arith.addf %13, %16 : vector<2x128xf32>
    %18 = arith.mulf %6, %17 : vector<2x128xf32>
    %c0_14 = arith.constant 0 : index
    %19 = memref.load %arg2[%c0_14] : memref<3xf32, #tpu.memory_space<smem>>
    %20 = vector.broadcast %19 : f32 to vector<2x128xf32>
    %21 = arith.addf %18, %20 : vector<2x128xf32>
    %c1_15 = arith.constant 1 : index
    %c0_16 = arith.constant 0 : index
    %22 = memref.load %arg1[%c1_15, %c0_16] : memref<3x3xf32, #tpu.memory_space<smem>>
    %23 = vector.broadcast %22 : f32 to vector<2x128xf32>
    %24 = arith.mulf %23, %1 : vector<2x128xf32>
    %c1_17 = arith.constant 1 : index
    %c1_18 = arith.constant 1 : index
    %25 = memref.load %arg1[%c1_17, %c1_18] : memref<3x3xf32, #tpu.memory_space<smem>>
    %26 = vector.broadcast %25 : f32 to vector<2x128xf32>
    %27 = arith.mulf %26, %3 : vector<2x128xf32>
    %28 = arith.addf %24, %27 : vector<2x128xf32>
    %c1_19 = arith.constant 1 : index
    %c2_20 = arith.constant 2 : index
    %29 = memref.load %arg1[%c1_19, %c2_20] : memref<3x3xf32, #tpu.memory_space<smem>>
    %30 = vector.broadcast %29 : f32 to vector<2x128xf32>
    %31 = arith.mulf %30, %5 : vector<2x128xf32>
    %32 = arith.addf %28, %31 : vector<2x128xf32>
    %33 = arith.mulf %6, %32 : vector<2x128xf32>
    %c1_21 = arith.constant 1 : index
    %34 = memref.load %arg2[%c1_21] : memref<3xf32, #tpu.memory_space<smem>>
    %35 = vector.broadcast %34 : f32 to vector<2x128xf32>
    %36 = arith.addf %33, %35 : vector<2x128xf32>
    %c2_22 = arith.constant 2 : index
    %c0_23 = arith.constant 0 : index
    %37 = memref.load %arg1[%c2_22, %c0_23] : memref<3x3xf32, #tpu.memory_space<smem>>
    %38 = vector.broadcast %37 : f32 to vector<2x128xf32>
    %39 = arith.mulf %38, %1 : vector<2x128xf32>
    %c2_24 = arith.constant 2 : index
    %c1_25 = arith.constant 1 : index
    %40 = memref.load %arg1[%c2_24, %c1_25] : memref<3x3xf32, #tpu.memory_space<smem>>
    %41 = vector.broadcast %40 : f32 to vector<2x128xf32>
    %42 = arith.mulf %41, %3 : vector<2x128xf32>
    %43 = arith.addf %39, %42 : vector<2x128xf32>
    %c2_26 = arith.constant 2 : index
    %c2_27 = arith.constant 2 : index
    %44 = memref.load %arg1[%c2_26, %c2_27] : memref<3x3xf32, #tpu.memory_space<smem>>
    %45 = vector.broadcast %44 : f32 to vector<2x128xf32>
    %46 = arith.mulf %45, %5 : vector<2x128xf32>
    %47 = arith.addf %43, %46 : vector<2x128xf32>
    %48 = arith.mulf %6, %47 : vector<2x128xf32>
    %c2_28 = arith.constant 2 : index
    %49 = memref.load %arg2[%c2_28] : memref<3xf32, #tpu.memory_space<smem>>
    %50 = vector.broadcast %49 : f32 to vector<2x128xf32>
    %51 = arith.addf %48, %50 : vector<2x128xf32>
    %52 = math.absf %51 : vector<2x128xf32>
    %cst = arith.constant 9.99999996E-13 : f32
    %53 = vector.broadcast %cst : f32 to vector<2x128xf32>
    %54 = arith.cmpf olt, %52, %53 : vector<2x128xf32>
    %cst_29 = arith.constant 0.000000e+00 : f32
    %55 = vector.broadcast %cst_29 : f32 to vector<2x128xf32>
    %56 = arith.cmpf olt, %51, %55 : vector<2x128xf32>
    %cst_30 = arith.constant -9.99999996E-13 : f32
    %cst_31 = arith.constant 9.99999996E-13 : f32
    %57 = vector.broadcast %cst_30 : f32 to vector<2x128xf32>
    %58 = vector.broadcast %cst_31 : f32 to vector<2x128xf32>
    %59 = arith.select %56, %57, %58 : vector<2x128xi1>, vector<2x128xf32>
    %60 = arith.select %54, %59, %51 : vector<2x128xi1>, vector<2x128xf32>
    %61 = tpu.reciprocal %60 {approx = true} : vector<2x128xf32> -> vector<2x128xf32>
    %62 = arith.mulf %60, %61 : vector<2x128xf32>
    %cst_32 = arith.constant 2.000000e+00 : f32
    %63 = vector.broadcast %cst_32 : f32 to vector<2x128xf32>
    %64 = arith.subf %63, %62 : vector<2x128xf32>
    %65 = arith.mulf %61, %64 : vector<2x128xf32>
    %66 = arith.mulf %60, %65 : vector<2x128xf32>
    %cst_33 = arith.constant 2.000000e+00 : f32
    %67 = vector.broadcast %cst_33 : f32 to vector<2x128xf32>
    %68 = arith.subf %67, %66 : vector<2x128xf32>
    %69 = arith.mulf %65, %68 : vector<2x128xf32>
    %70 = arith.mulf %21, %69 : vector<2x128xf32>
    %cst_34 = arith.constant 1.250000e-01 : f32
    %71 = vector.broadcast %cst_34 : f32 to vector<2x128xf32>
    %72 = arith.mulf %70, %71 : vector<2x128xf32>
    %cst_35 = arith.constant 1.000000e+00 : f32
    %73 = vector.broadcast %cst_35 : f32 to vector<2x128xf32>
    %74 = arith.subf %72, %73 : vector<2x128xf32>
    %75 = arith.mulf %36, %69 : vector<2x128xf32>
    %cst_36 = arith.constant 1.250000e-01 : f32
    %76 = vector.broadcast %cst_36 : f32 to vector<2x128xf32>
    %77 = arith.mulf %75, %76 : vector<2x128xf32>
    %cst_37 = arith.constant 1.000000e+00 : f32
    %78 = vector.broadcast %cst_37 : f32 to vector<2x128xf32>
    %79 = arith.subf %77, %78 : vector<2x128xf32>
    %c0_38 = arith.constant 0 : index
    %c0_39 = arith.constant 0 : index
    %80 = vector.load %arg5[%c0_38, %c0_39] : memref<2x128xf32, #tpu.memory_space<vmem>>, vector<2x128xf32>
    tpu.vector_store %arg5[%c0_38, %c0_39], %74 {strides = array<i32>} : memref<2x128xf32, #tpu.memory_space<vmem>>, vector<2x128xf32>,
    %c0_40 = arith.constant 0 : index
    %c0_41 = arith.constant 0 : index
    %81 = vector.load %arg6[%c0_40, %c0_41] : memref<2x128xf32, #tpu.memory_space<vmem>>, vector<2x128xf32>
    tpu.vector_store %arg6[%c0_40, %c0_41], %79 {strides = array<i32>} : memref<2x128xf32, #tpu.memory_space<vmem>>, vector<2x128xf32>,
    %cst_42 = arith.constant 1.000000e+00 : f32
    %82 = vector.broadcast %cst_42 : f32 to vector<2x128xf32>
    %83 = arith.addf %74, %82 : vector<2x128xf32>
    %cst_43 = arith.constant 8.000000e+00 : f32
    %84 = vector.broadcast %cst_43 : f32 to vector<2x128xf32>
    %85 = arith.mulf %83, %84 : vector<2x128xf32>
    %cst_44 = arith.constant 5.000000e-01 : f32
    %86 = vector.broadcast %cst_44 : f32 to vector<2x128xf32>
    %87 = arith.subf %85, %86 : vector<2x128xf32>
    %cst_45 = arith.constant 1.000000e+00 : f32
    %88 = vector.broadcast %cst_45 : f32 to vector<2x128xf32>
    %89 = arith.addf %79, %88 : vector<2x128xf32>
    %cst_46 = arith.constant 8.000000e+00 : f32
    %90 = vector.broadcast %cst_46 : f32 to vector<2x128xf32>
    %91 = arith.mulf %89, %90 : vector<2x128xf32>
    %cst_47 = arith.constant 5.000000e-01 : f32
    %92 = vector.broadcast %cst_47 : f32 to vector<2x128xf32>
    %93 = arith.subf %91, %92 : vector<2x128xf32>
    %cst_48 = arith.constant -4.000000e+00 : f32
    %cst_49 = arith.constant 2.000000e+01 : f32
    %94 = vector.broadcast %cst_48 : f32 to vector<2x128xf32>
    %95 = arith.maximumf %94, %87 : vector<2x128xf32>
    %96 = vector.broadcast %cst_49 : f32 to vector<2x128xf32>
    %97 = arith.minimumf %96, %95 : vector<2x128xf32>
    %cst_50 = arith.constant -4.000000e+00 : f32
    %cst_51 = arith.constant 2.000000e+01 : f32
    %98 = vector.broadcast %cst_50 : f32 to vector<2x128xf32>
    %99 = arith.maximumf %98, %93 : vector<2x128xf32>
    %100 = vector.broadcast %cst_51 : f32 to vector<2x128xf32>
    %101 = arith.minimumf %100, %99 : vector<2x128xf32>
    %102 = math.floor %97 : vector<2x128xf32>
    %103 = math.floor %101 : vector<2x128xf32>
    %104 = arith.subf %97, %102 : vector<2x128xf32>
    %105 = arith.subf %101, %103 : vector<2x128xf32>
    %106 = arith.fptosi %102 : vector<2x128xf32> to vector<2x128xi32>
    %107 = arith.fptosi %103 : vector<2x128xf32> to vector<2x128xi32>
    %c1_i32 = arith.constant 1 : i32
    %108 = vector.broadcast %c1_i32 : i32 to vector<2x128xi32>
    %109 = arith.addi %106, %108 : vector<2x128xi32>
    %c1_i32_52 = arith.constant 1 : i32
    %110 = vector.broadcast %c1_i32_52 : i32 to vector<2x128xi32>
    %111 = arith.addi %107, %110 : vector<2x128xi32>
    %c0_i32 = arith.constant 0 : i32
    %112 = vector.broadcast %c0_i32 : i32 to vector<2x128xi32>
    %113 = arith.cmpi sge, %106, %112 : vector<2x128xi32>
    %c16_i32 = arith.constant 16 : i32
    %114 = vector.broadcast %c16_i32 : i32 to vector<2x128xi32>
    %115 = arith.cmpi slt, %106, %114 : vector<2x128xi32>
    %116 = arith.andi %113, %115 : vector<2x128xi1>
    %c0_i32_53 = arith.constant 0 : i32
    %117 = vector.broadcast %c0_i32_53 : i32 to vector<2x128xi32>
    %118 = arith.cmpi sge, %109, %117 : vector<2x128xi32>
    %c16_i32_54 = arith.constant 16 : i32
    %119 = vector.broadcast %c16_i32_54 : i32 to vector<2x128xi32>
    %120 = arith.cmpi slt, %109, %119 : vector<2x128xi32>
    %121 = arith.andi %118, %120 : vector<2x128xi1>
    %c0_i32_55 = arith.constant 0 : i32
    %122 = vector.broadcast %c0_i32_55 : i32 to vector<2x128xi32>
    %123 = arith.cmpi sge, %107, %122 : vector<2x128xi32>
    %c16_i32_56 = arith.constant 16 : i32
    %124 = vector.broadcast %c16_i32_56 : i32 to vector<2x128xi32>
    %125 = arith.cmpi slt, %107, %124 : vector<2x128xi32>
    %126 = arith.andi %123, %125 : vector<2x128xi1>
    %c0_i32_57 = arith.constant 0 : i32
    %127 = vector.broadcast %c0_i32_57 : i32 to vector<2x128xi32>
    %128 = arith.cmpi sge, %111, %127 : vector<2x128xi32>
    %c16_i32_58 = arith.constant 16 : i32
    %129 = vector.broadcast %c16_i32_58 : i32 to vector<2x128xi32>
    %130 = arith.cmpi slt, %111, %129 : vector<2x128xi32>
    %131 = arith.andi %128, %130 : vector<2x128xi1>
    %132 = arith.andi %126, %116 : vector<2x128xi1>
    %cst_59 = arith.constant 1.000000e+00 : f32
    %133 = vector.broadcast %cst_59 : f32 to vector<2x128xf32>
    %134 = arith.subf %133, %105 : vector<2x128xf32>
    %cst_60 = arith.constant 1.000000e+00 : f32
    %135 = vector.broadcast %cst_60 : f32 to vector<2x128xf32>
    %136 = arith.subf %135, %104 : vector<2x128xf32>
    %137 = arith.mulf %134, %136 : vector<2x128xf32>
    %cst_61 = arith.constant 0.000000e+00 : f32
    %138 = vector.broadcast %cst_61 : f32 to vector<2x128xf32>
    %139 = arith.select %132, %137, %138 : vector<2x128xi1>, vector<2x128xf32>
    %c0_62 = arith.constant 0 : index
    %c0_63 = arith.constant 0 : index
    %140 = vector.load %arg11[%c0_62, %c0_63] : memref<2x128xf32, #tpu.memory_space<vmem>>, vector<2x128xf32>
    tpu.vector_store %arg11[%c0_62, %c0_63], %139 {strides = array<i32>} : memref<2x128xf32, #tpu.memory_space<vmem>>, vector<2x128xf32>,
    %141 = arith.andi %126, %121 : vector<2x128xi1>
    %cst_64 = arith.constant 1.000000e+00 : f32
    %142 = vector.broadcast %cst_64 : f32 to vector<2x128xf32>
    %143 = arith.subf %142, %105 : vector<2x128xf32>
    %144 = arith.mulf %143, %104 : vector<2x128xf32>
    %cst_65 = arith.constant 0.000000e+00 : f32
    %145 = vector.broadcast %cst_65 : f32 to vector<2x128xf32>
    %146 = arith.select %141, %144, %145 : vector<2x128xi1>, vector<2x128xf32>
    %c0_66 = arith.constant 0 : index
    %c0_67 = arith.constant 0 : index
    %147 = vector.load %arg12[%c0_66, %c0_67] : memref<2x128xf32, #tpu.memory_space<vmem>>, vector<2x128xf32>
    tpu.vector_store %arg12[%c0_66, %c0_67], %146 {strides = array<i32>} : memref<2x128xf32, #tpu.memory_space<vmem>>, vector<2x128xf32>,
    %148 = arith.andi %131, %116 : vector<2x128xi1>
    %cst_68 = arith.constant 1.000000e+00 : f32
    %149 = vector.broadcast %cst_68 : f32 to vector<2x128xf32>
    %150 = arith.subf %149, %104 : vector<2x128xf32>
    %151 = arith.mulf %105, %150 : vector<2x128xf32>
    %cst_69 = arith.constant 0.000000e+00 : f32
    %152 = vector.broadcast %cst_69 : f32 to vector<2x128xf32>
    %153 = arith.select %148, %151, %152 : vector<2x128xi1>, vector<2x128xf32>
    %c0_70 = arith.constant 0 : index
    %c0_71 = arith.constant 0 : index
    %154 = vector.load %arg13[%c0_70, %c0_71] : memref<2x128xf32, #tpu.memory_space<vmem>>, vector<2x128xf32>
    tpu.vector_store %arg13[%c0_70, %c0_71], %153 {strides = array<i32>} : memref<2x128xf32, #tpu.memory_space<vmem>>, vector<2x128xf32>,
    %155 = arith.andi %131, %121 : vector<2x128xi1>
    %156 = arith.mulf %105, %104 : vector<2x128xf32>
    %cst_72 = arith.constant 0.000000e+00 : f32
    %157 = vector.broadcast %cst_72 : f32 to vector<2x128xf32>
    %158 = arith.select %155, %156, %157 : vector<2x128xi1>, vector<2x128xf32>
    %c0_73 = arith.constant 0 : index
    %c0_74 = arith.constant 0 : index
    %159 = vector.load %arg14[%c0_73, %c0_74] : memref<2x128xf32, #tpu.memory_space<vmem>>, vector<2x128xf32>
    tpu.vector_store %arg14[%c0_73, %c0_74], %158 {strides = array<i32>} : memref<2x128xf32, #tpu.memory_space<vmem>>, vector<2x128xf32>,
    %c0_i32_75 = arith.constant 0 : i32
    %c15_i32 = arith.constant 15 : i32
    %160 = vector.broadcast %c0_i32_75 : i32 to vector<2x128xi32>
    %161 = arith.maxsi %160, %106 : vector<2x128xi32>
    %162 = vector.broadcast %c15_i32 : i32 to vector<2x128xi32>
    %163 = arith.minsi %162, %161 : vector<2x128xi32>
    %c0_i32_76 = arith.constant 0 : i32
    %c15_i32_77 = arith.constant 15 : i32
    %164 = vector.broadcast %c0_i32_76 : i32 to vector<2x128xi32>
    %165 = arith.maxsi %164, %109 : vector<2x128xi32>
    %166 = vector.broadcast %c15_i32_77 : i32 to vector<2x128xi32>
    %167 = arith.minsi %166, %165 : vector<2x128xi32>
    %c0_i32_78 = arith.constant 0 : i32
    %c15_i32_79 = arith.constant 15 : i32
    %168 = vector.broadcast %c0_i32_78 : i32 to vector<2x128xi32>
    %169 = arith.maxsi %168, %107 : vector<2x128xi32>
    %170 = vector.broadcast %c15_i32_79 : i32 to vector<2x128xi32>
    %171 = arith.minsi %170, %169 : vector<2x128xi32>
    %c0_i32_80 = arith.constant 0 : i32
    %c15_i32_81 = arith.constant 15 : i32
    %172 = vector.broadcast %c0_i32_80 : i32 to vector<2x128xi32>
    %173 = arith.maxsi %172, %111 : vector<2x128xi32>
    %174 = vector.broadcast %c15_i32_81 : i32 to vector<2x128xi32>
    %175 = arith.minsi %174, %173 : vector<2x128xi32>
    %c16_i32_82 = arith.constant 16 : i32
    %176 = vector.broadcast %c16_i32_82 : i32 to vector<2x128xi32>
    %177 = arith.muli %171, %176 : vector<2x128xi32>
    %c16_i32_83 = arith.constant 16 : i32
    %178 = vector.broadcast %c16_i32_83 : i32 to vector<2x128xi32>
    %179 = arith.muli %175, %178 : vector<2x128xi32>
    %180 = arith.addi %177, %163 : vector<2x128xi32>
    %c0_84 = arith.constant 0 : index
    %c0_85 = arith.constant 0 : index
    %181 = vector.load %arg7[%c0_84, %c0_85] : memref<2x128xi32, #tpu.memory_space<vmem>>, vector<2x128xi32>
    tpu.vector_store %arg7[%c0_84, %c0_85], %180 {strides = array<i32>} : memref<2x128xi32, #tpu.memory_space<vmem>>, vector<2x128xi32>,
    %182 = arith.addi %177, %167 : vector<2x128xi32>
    %c0_86 = arith.constant 0 : index
    %c0_87 = arith.constant 0 : index
    %183 = vector.load %arg8[%c0_86, %c0_87] : memref<2x128xi32, #tpu.memory_space<vmem>>, vector<2x128xi32>
    tpu.vector_store %arg8[%c0_86, %c0_87], %182 {strides = array<i32>} : memref<2x128xi32, #tpu.memory_space<vmem>>, vector<2x128xi32>,
    %184 = arith.addi %179, %163 : vector<2x128xi32>
    %c0_88 = arith.constant 0 : index
    %c0_89 = arith.constant 0 : index
    %185 = vector.load %arg9[%c0_88, %c0_89] : memref<2x128xi32, #tpu.memory_space<vmem>>, vector<2x128xi32>
    tpu.vector_store %arg9[%c0_88, %c0_89], %184 {strides = array<i32>} : memref<2x128xi32, #tpu.memory_space<vmem>>, vector<2x128xi32>,
    %186 = arith.addi %179, %167 : vector<2x128xi32>
    %c0_90 = arith.constant 0 : index
    %c0_91 = arith.constant 0 : index
    %187 = vector.load %arg10[%c0_90, %c0_91] : memref<2x128xi32, #tpu.memory_space<vmem>>, vector<2x128xi32>
    tpu.vector_store %arg10[%c0_90, %c0_91], %186 {strides = array<i32>} : memref<2x128xi32, #tpu.memory_space<vmem>>, vector<2x128xi32>,
    return
  }
  func.func @transform_0(%arg0: i32) -> (i32, i32) {
    %c0_i32 = arith.constant 0 : i32
    %c0_i32_0 = arith.constant 0 : i32
    %c0_i32_1 = arith.constant 0 : i32
    return %c0_i32, %c0_i32_0 : i32, i32
  }
  func.func @transform_1(%arg0: i32) -> i32 {
    %c0_i32 = arith.constant 0 : i32
    %c0_i32_0 = arith.constant 0 : i32
    return %c0_i32 : i32
  }
  func.func @transform_2(%arg0: i32) -> (i32, i32, i32) {
    %c0_i32 = arith.constant 0 : i32
    %c0_i32_0 = arith.constant 0 : i32
    %c0_i32_1 = arith.constant 0 : i32
    return %c0_i32, %arg0, %c0_i32_0 : i32, i32, i32
  }
  func.func @transform_3(%arg0: i32) -> (i32, i32) {
    %c0_i32 = arith.constant 0 : i32
    %c0_i32_0 = arith.constant 0 : i32
    return %arg0, %c0_i32 : i32, i32
  }
  func.func @transform_4(%arg0: i32) -> (i32, i32) {
    %c0_i32 = arith.constant 0 : i32
    %c0_i32_0 = arith.constant 0 : i32
    return %arg0, %c0_i32 : i32, i32
  }
  func.func @transform_5(%arg0: i32) -> (i32, i32) {
    %c0_i32 = arith.constant 0 : i32
    %c0_i32_0 = arith.constant 0 : i32
    return %arg0, %c0_i32 : i32, i32
  }
  func.func @transform_6(%arg0: i32) -> (i32, i32) {
    %c0_i32 = arith.constant 0 : i32
    %c0_i32_0 = arith.constant 0 : i32
    return %arg0, %c0_i32 : i32, i32
  }
  func.func @transform_7(%arg0: i32) -> (i32, i32) {
    %c0_i32 = arith.constant 0 : i32
    %c0_i32_0 = arith.constant 0 : i32
    return %arg0, %c0_i32 : i32, i32
  }
  func.func @transform_8(%arg0: i32) -> (i32, i32) {
    %c0_i32 = arith.constant 0 : i32
    %c0_i32_0 = arith.constant 0 : i32
    return %arg0, %c0_i32 : i32, i32
  }
  func.func @transform_9(%arg0: i32) -> (i32, i32) {
    %c0_i32 = arith.constant 0 : i32
    %c0_i32_0 = arith.constant 0 : i32
    return %arg0, %c0_i32 : i32, i32
  }
  func.func @transform_10(%arg0: i32) -> (i32, i32) {
    %c0_i32 = arith.constant 0 : i32
    %c0_i32_0 = arith.constant 0 : i32
    return %arg0, %c0_i32 : i32, i32
  }
  func.func @transform_11(%arg0: i32) -> (i32, i32) {
    %c0_i32 = arith.constant 0 : i32
    %c0_i32_0 = arith.constant 0 : i32
    return %arg0, %c0_i32 : i32, i32
  }
  func.func @transform_12(%arg0: i32) -> (i32, i32) {
    %c0_i32 = arith.constant 0 : i32
    %c0_i32_0 = arith.constant 0 : i32
    return %arg0, %c0_i32 : i32, i32
  }
  func.func @transform_13(%arg0: i32) -> (i32, i32) {
    %c0_i32 = arith.constant 0 : i32
    %c0_i32_0 = arith.constant 0 : i32
    return %arg0, %c0_i32 : i32, i32
  }
}

</mosaic_0001>

<llo_original>
// kernel: tpu_custom_call.1
$region0: #{tpu_custom_call.1}
  #allocation0 [shape = 'u32[]', space=smem, size = 0x4, offset = 0x4, fixed_abs, tag = 'smem constant byte address 0x4 - core index']
  #allocation1 [shape = 'u32[144,128]{1,0:T(1,128)}', space=vmem, size = 0x12000, scoped, tag = 'internal scratch']
  %s0 = inlined_call_operand.hbm [shape: f32[3,3], index: 0, kind: input, shape index: {}]
  %s1 = inlined_call_operand.vmem [shape: f32[3], index: 1, kind: input, shape index: {}]
  %s2 = inlined_call_operand.hbm [shape: f32[3,2,128], index: 2, kind: input, shape index: {}]
  %s3 = inlined_call_operand.vmem [shape: f32[2,128], index: 3, kind: input, shape index: {}]
  %s4 = inlined_call_operand.hbm [shape: f32[2,128], index: 4, kind: output, shape index: {0}]
  %s5 = inlined_call_operand.hbm [shape: f32[2,128], index: 5, kind: output, shape index: {1}]
  %s6 = inlined_call_operand.hbm [shape: s32[2,128], index: 6, kind: output, shape index: {2}]
  %s7 = inlined_call_operand.hbm [shape: s32[2,128], index: 7, kind: output, shape index: {3}]
  %s8 = inlined_call_operand.hbm [shape: s32[2,128], index: 8, kind: output, shape index: {4}]
  %s9 = inlined_call_operand.hbm [shape: s32[2,128], index: 9, kind: output, shape index: {5}]
  %s10 = inlined_call_operand.hbm [shape: f32[2,128], index: 10, kind: output, shape index: {6}]
  %s11 = inlined_call_operand.hbm [shape: f32[2,128], index: 11, kind: output, shape index: {7}]
  %s12 = inlined_call_operand.hbm [shape: f32[2,128], index: 12, kind: output, shape index: {8}]
  %s13 = inlined_call_operand.hbm [shape: f32[2,128], index: 13, kind: output, shape index: {9}]
  %14 = xla_tuple %s4, %s5, %s6, %s7, %s8, %s9, %s10, %s11, %s12, %s13
  %s15 = sld [smem:[#allocation0]]
  $region110: #{tpu_custom_call.1} parent=0
    _
  %s17 = ssub.s32 1, %s15
  %s18 = scalar_select 0, %s17, %s15
  $region1: #{tpu_custom_call.1} parent=0
    #allocation2 [shape = 'u8[2048]{0}', space=smem, size = 0x800, scoped, tag = 'input window, operand 0, single buffered']
    #allocation3 [shape = 's32[1]{0}', space=sflag, size = 0x4, scoped, tag = 'scoped memory for tpu_custom_call.1']
    #allocation4 [shape = 's32[1]{0}', space=sflag, size = 0x4, scoped, tag = 'scoped memory for tpu_custom_call.1']
    #allocation5 [shape = 's32[1]{0}', space=sflag, size = 0x4, scoped, tag = 'scoped memory for tpu_custom_call.1']
    #allocation6 [shape = 's32[1]{0}', space=sflag, size = 0x4, scoped, tag = 'scoped memory for tpu_custom_call.1']
    #allocation7 [shape = 'u8[512]{0}', space=smem, size = 0x200, scoped, tag = 'input window, operand 1, single buffered']
    #allocation8 [shape = 'u8[3072]{0}', space=vmem, size = 0xc00, scoped, tag = 'input window, operand 2, single buffered']
    #allocation9 [shape = 'u8[1024]{0}', space=vmem, size = 0x400, scoped, tag = 'output window, operand 0, single buffered']
    #allocation10 [shape = 'u8[1024]{0}', space=vmem, size = 0x400, scoped, tag = 'output window, operand 1, single buffered']
    #allocation11 [shape = 's32[1]{0}', space=sflag, size = 0x4, scoped, tag = 'scoped memory for tpu_custom_call.1']
    #allocation12 [shape = 'u8[1024]{0}', space=vmem, size = 0x400, scoped, tag = 'output window, operand 2, single buffered']
    #allocation13 [shape = 'u8[1024]{0}', space=vmem, size = 0x400, scoped, tag = 'output window, operand 3, single buffered']
    #allocation14 [shape = 's32[1]{0}', space=sflag, size = 0x4, scoped, tag = 'scoped memory for tpu_custom_call.1']
    #allocation15 [shape = 'u8[1024]{0}', space=vmem, size = 0x400, scoped, tag = 'output window, operand 4, single buffered']
    #allocation16 [shape = 'u8[1024]{0}', space=vmem, size = 0x400, scoped, tag = 'output window, operand 5, single buffered']
    #allocation17 [shape = 's32[1]{0}', space=sflag, size = 0x4, scoped, tag = 'scoped memory for tpu_custom_call.1']
    #allocation18 [shape = 'u8[1024]{0}', space=vmem, size = 0x400, scoped, tag = 'output window, operand 6, single buffered']
    #allocation19 [shape = 'u8[1024]{0}', space=vmem, size = 0x400, scoped, tag = 'output window, operand 7, single buffered']
    #allocation20 [shape = 's32[1]{0}', space=sflag, size = 0x4, scoped, tag = 'scoped memory for tpu_custom_call.1']
    #allocation21 [shape = 'u8[1024]{0}', space=vmem, size = 0x400, scoped, tag = 'output window, operand 8, single buffered']
    #allocation22 [shape = 'u8[1024]{0}', space=vmem, size = 0x400, scoped, tag = 'output window, operand 9, single buffered']
    #allocation23 [shape = 's32[1]{0}', space=sflag, size = 0x4, scoped, tag = 'scoped memory for tpu_custom_call.1']
    %19 = vsyncpa [#allocation5], 0
    %20 = vsyncpa [#allocation6], 0
    %21 = vsyncpa [#allocation3], 0
    %22 = vsyncpa [#allocation4], 0
    %23 = vsyncpa [#allocation11], 0
    %24 = vsyncpa [#allocation14], 0
    %25 = vsyncpa [#allocation17], 0
    %26 = vsyncpa [#allocation20], 0
    %27 = vsyncpa [#allocation23], 0
    // Predicated region
    $region2: #{tpu_custom_call.1} parent=1 // pred_check
      _
    $region3: #{tpu_custom_call.1} parent=1 // pred_check_branch
      %29 = sbr.rel (0) target = $region5
    $region4: #{tpu_custom_call.1} parent=1 // pred_region
      %s31 = ssub.s32 64, 64
      %32 = vsyncadd [#allocation5], %s31
      %35 = dma.hbm_to_smem %s0, 64, [#allocation2], [#allocation5]
    $region5: #{tpu_custom_call.1} parent=1 // pred_fallthru
      _
    // Predicated region
    $region6: #{tpu_custom_call.1} parent=1 // pred_check
      _
    $region7: #{tpu_custom_call.1} parent=1 // pred_check_branch
      %37 = sbr.rel (0) target = $region9
    $region8: #{tpu_custom_call.1} parent=1 // pred_region
      %s39 = ssub.s32 16, 16
      %40 = vsyncadd [#allocation6], %s39
      %s42 = sshll.u32 %s1, 4
      %s43 = int_to_ptr.vmem [resolvable:$true] %s42
      %45 = dma.vmem_to_smem %s43, 16, [#allocation7], [#allocation6]
    $region9: #{tpu_custom_call.1} parent=1 // pred_fallthru
      _
    // Predicated region
    $region10: #{tpu_custom_call.1} parent=1 // pred_check
      _
    $region11: #{tpu_custom_call.1} parent=1 // pred_check_branch
      %47 = sbr.rel (0) target = $region13
    $region12: #{tpu_custom_call.1} parent=1 // pred_region
      %s49 = ssub.s32 96, 96
      %50 = vsyncadd [#allocation3], %s49
      %s51 = sshll.u32 [#allocation8], 4
      %s52 = int_to_ptr.vmem [resolvable:$true] %s51
      %57 = dma.hbm_to_vmem [thread:$0]  %s2, 96, %s52, [#allocation3], 32, 32, 2
    $region13: #{tpu_custom_call.1} parent=1 // pred_fallthru
      _
    // Predicated region
    $region14: #{tpu_custom_call.1} parent=1 // pred_check
      _
    $region15: #{tpu_custom_call.1} parent=1 // pred_check_branch
      %59 = sbr.rel (0) target = $region17
    $region16: #{tpu_custom_call.1} parent=1 // pred_region
      _
    $region17: #{tpu_custom_call.1} parent=1 // pred_fallthru
      _
    // Predicated region
    $region18: #{tpu_custom_call.1} parent=1 // pred_check
      _
    $region19: #{tpu_custom_call.1} parent=1 // pred_check_branch
      %61 = sbr.rel (0) target = $region21
    $region20: #{tpu_custom_call.1} parent=1 // pred_region
      %62 = dma.done [#allocation5], 64
    $region21: #{tpu_custom_call.1} parent=1 // pred_fallthru
      _
    // Predicated region
    $region22: #{tpu_custom_call.1} parent=1 // pred_check
      _
    $region23: #{tpu_custom_call.1} parent=1 // pred_check_branch
      %64 = sbr.rel (0) target = $region25
    $region24: #{tpu_custom_call.1} parent=1 // pred_region
      %65 = dma.done [#allocation6], 16
    $region25: #{tpu_custom_call.1} parent=1 // pred_fallthru
      _
    // Predicated region
    $region26: #{tpu_custom_call.1} parent=1 // pred_check
      _
    $region27: #{tpu_custom_call.1} parent=1 // pred_check_branch
      %67 = sbr.rel (0) target = $region29
    $region28: #{tpu_custom_call.1} parent=1 // pred_region
      %68 = dma.done [#allocation3], 96
    $region29: #{tpu_custom_call.1} parent=1 // pred_fallthru
      _
    %69 = sfence
    %v70 = vld [vmem:[#allocation8] sm:$0x3]
    %s71 = scalar_lea.vmem [#allocation8], 2
    %v72 = vld [vmem:[%s71] sm:$0x3]
    %s73 = scalar_lea.vmem [#allocation8], 4
    %v74 = vld [vmem:[%s73] sm:$0x3]
    %v75 = vld [vmem:[%s3] sm:$0x3]
    %s76 = sld [smem:[#allocation2]]
    %v77 = vstv %s76
    %v78 = vmul.f32 %v77, %v70
    %s79 = sld [smem:[#allocation2 + $0x1]]
    %v80 = vstv %s79
    %v81 = vmul.f32 %v80, %v72
    %v82 = vadd.f32 %v78, %v81
    %s83 = sld [smem:[#allocation2 + $0x2]]
    %v84 = vstv %s83
    %v85 = vmul.f32 %v84, %v74
    %v86 = vadd.f32 %v82, %v85
    %v87 = vmul.f32 %v75, %v86
    %s88 = sld [smem:[#allocation7]]
    %v89 = vstv %s88
    %v90 = vadd.f32 %v87, %v89
    %s91 = sld [smem:[#allocation2 + $0x80]]
    %v92 = vstv %s91
    %v93 = vmul.f32 %v92, %v70
    %s94 = sld [smem:[#allocation2 + $0x81]]
    %v95 = vstv %s94
    %v96 = vmul.f32 %v95, %v72
    %v97 = vadd.f32 %v93, %v96
    %s98 = sld [smem:[#allocation2 + $0x82]]
    %v99 = vstv %s98
    %v100 = vmul.f32 %v99, %v74
    %v101 = vadd.f32 %v97, %v100
    %v102 = vmul.f32 %v75, %v101
    %s103 = sld [smem:[#allocation7 + $0x1]]
    %v104 = vstv %s103
    %v105 = vadd.f32 %v102, %v104
    %s106 = sld [smem:[#allocation2 + $0x100]]
    %v107 = vstv %s106
    %v108 = vmul.f32 %v107, %v70
    %s109 = sld [smem:[#allocation2 + $0x101]]
    %v110 = vstv %s109
    %v111 = vmul.f32 %v110, %v72
    %v112 = vadd.f32 %v108, %v111
    %s113 = sld [smem:[#allocation2 + $0x102]]
    %v114 = vstv %s113
    %v115 = vmul.f32 %v114, %v74
    %v116 = vadd.f32 %v112, %v115
    %v117 = vmul.f32 %v75, %v116
    %s118 = sld [smem:[#allocation7 + $0x2]]
    %v119 = vstv %s118
    %v120 = vadd.f32 %v117, %v119
    %v121 = vand.u32 2147483647, %v120
    %vm122 = vcmp.lt.f32.partialorder %v121, 1e-12
    %vm123 = vcmp.lt.f32.partialorder %v120, 0.0
    %v124 = vsel %vm123, -1e-12, 1e-12
    %v125 = vsel %vm122, %v124, %v120
    %v126 = vrcp.pop %v125
    %v127 = vmul.f32 %v125, %v126
    %v128 = vsub.f32 2.0, %v127
    %v129 = vmul.f32 %v126, %v128
    %v130 = vmul.f32 %v125, %v129
    %v131 = vsub.f32 2.0, %v130
    %v132 = vmul.f32 %v129, %v131
    %v133 = vmul.f32 %v90, %v132
    %v134 = vmul.f32 %v133, 0.125
    %v135 = vsub.f32 %v134, 1.0
    %v136 = vmul.f32 %v105, %v132
    %v137 = vmul.f32 %v136, 0.125
    %v138 = vsub.f32 %v137, 1.0
    %139 = vst [vmem:[#allocation9] sm:$0x3] %v135
    %140 = vst [vmem:[#allocation10] sm:$0x3] %v138
    %v141 = vadd.f32 %v135, 1.0
    %v142 = vmul.f32 %v141, 8.0
    %v143 = vsub.f32 %v142, 0.5
    %v144 = vadd.f32 %v138, 1.0
    %v145 = vmul.f32 %v144, 8.0
    %v146 = vsub.f32 %v145, 0.5
    %v147 = vmax.f32 %v143, -4.0
    %v148 = vmin.f32 %v147, 20.0
    %v149 = vmax.f32 %v146, -4.0
    %v150 = vmin.f32 %v149, 20.0
    %v151 = vfloor.f32 %v148
    %v152 = vfloor.f32 %v150
    %v153 = vsub.f32 %v148, %v151
    %v154 = vsub.f32 %v150, %v152
    %v155 = vcvt.f32.s32.to.zero.pseudo %v151
    %v156 = vcvt.f32.s32.to.zero.pseudo %v152
    %v157 = vadd.s32 %v155, 1
    %v158 = vadd.s32 %v156, 1
    %vm159 = vcmp.ge.s32.totalorder %v155, 0
    %vm160 = vcmp.lt.s32.totalorder %v155, 16
    %vm161 = vmand %vm159, %vm160
    %vm162 = vcmp.ge.s32.totalorder %v157, 0
    %vm163 = vcmp.lt.s32.totalorder %v157, 16
    %vm164 = vmand %vm162, %vm163
    %vm165 = vcmp.ge.s32.totalorder %v156, 0
    %vm166 = vcmp.lt.s32.totalorder %v156, 16
    %vm167 = vmand %vm165, %vm166
    %vm168 = vcmp.ge.s32.totalorder %v158, 0
    %vm169 = vcmp.lt.s32.totalorder %v158, 16
    %vm170 = vmand %vm168, %vm169
    %vm171 = vmand %vm167, %vm161
    %v172 = vsub.f32 1.0, %v154
    %v173 = vsub.f32 1.0, %v153
    %v174 = vmul.f32 %v172, %v173
    %v175 = vsel %vm171, %v174, 0.0
    %176 = vst [vmem:[#allocation18] sm:$0x3] %v175
    %vm177 = vmand %vm167, %vm164
    %v178 = vmul.f32 %v172, %v153
    %v179 = vsel %vm177, %v178, 0.0
    %180 = vst [vmem:[#allocation19] sm:$0x3] %v179
    %vm181 = vmand %vm170, %vm161
    %v182 = vmul.f32 %v154, %v173
    %v183 = vsel %vm181, %v182, 0.0
    %184 = vst [vmem:[#allocation21] sm:$0x3] %v183
    %vm185 = vmand %vm170, %vm164
    %v186 = vmul.f32 %v154, %v153
    %v187 = vsel %vm185, %v186, 0.0
    %188 = vst [vmem:[#allocation22] sm:$0x3] %v187
    %vm189 = vcmp.gt.s32.totalorder %v155, 0
    %v190 = vsel %vm189, %v155, 0
    %vm191 = vcmp.lt.s32.totalorder %v190, 15
    %v192 = vsel %vm191, %v190, 15
    %vm193 = vcmp.gt.s32.totalorder %v157, 0
    %v194 = vsel %vm193, %v157, 0
    %vm195 = vcmp.lt.s32.totalorder %v194, 15
    %v196 = vsel %vm195, %v194, 15
    %vm197 = vcmp.gt.s32.totalorder %v156, 0
    %v198 = vsel %vm197, %v156, 0
    %vm199 = vcmp.lt.s32.totalorder %v198, 15
    %v200 = vsel %vm199, %v198, 15
    %vm201 = vcmp.gt.s32.totalorder %v158, 0
    %v202 = vsel %vm201, %v158, 0
    %vm203 = vcmp.lt.s32.totalorder %v202, 15
    %v204 = vsel %vm203, %v202, 15
    %v205 = vmul.u32 %v200, 16
    %v206 = vmul.u32 %v204, 16
    %v207 = vadd.s32 %v205, %v192
    %208 = vst [vmem:[#allocation12] sm:$0x3] %v207
    %v209 = vadd.s32 %v205, %v196
    %210 = vst [vmem:[#allocation13] sm:$0x3] %v209
    %v211 = vadd.s32 %v206, %v192
    %212 = vst [vmem:[#allocation15] sm:$0x3] %v211
    %v213 = vadd.s32 %v206, %v196
    %214 = vst [vmem:[#allocation16] sm:$0x3] %v213
    // Predicated region
    $region30: #{tpu_custom_call.1} parent=1 // pred_check
      _
    $region31: #{tpu_custom_call.1} parent=1 // pred_check_branch
      %216 = sbr.rel (0) target = $region33
    $region32: #{tpu_custom_call.1} parent=1 // pred_region
      %s218 = ssub.s32 32, 32
      %219 = vsyncadd [#allocation4], %s218
      %s221 = sshll.u32 [#allocation9], 4
      %s222 = int_to_ptr.vmem [resolvable:$true] %s221
      %224 = dma.vmem_to_hbm [thread:$0]  %s222, 32, %s4, [#allocation4]
    $region33: #{tpu_custom_call.1} parent=1 // pred_fallthru
      _
    // Predicated region
    $region34: #{tpu_custom_call.1} parent=1 // pred_check
      _
    $region35: #{tpu_custom_call.1} parent=1 // pred_check_branch
      %226 = sbr.rel (0) target = $region37
    $region36: #{tpu_custom_call.1} parent=1 // pred_region
      %s228 = ssub.s32 32, 32
      %229 = vsyncadd [#allocation11], %s228
      %s231 = sshll.u32 [#allocation10], 4
      %s232 = int_to_ptr.vmem [resolvable:$true] %s231
      %234 = dma.vmem_to_hbm [thread:$0]  %s232, 32, %s5, [#allocation11]
    $region37: #{tpu_custom_call.1} parent=1 // pred_fallthru
      _
    // Predicated region
    $region38: #{tpu_custom_call.1} parent=1 // pred_check
      _
    $region39: #{tpu_custom_call.1} parent=1 // pred_check_branch
      %236 = sbr.rel (0) target = $region41
    $region40: #{tpu_custom_call.1} parent=1 // pred_region
      %s238 = ssub.s32 32, 32
      %239 = vsyncadd [#allocation11], %s238
      %s241 = sshll.u32 [#allocation12], 4
      %s242 = int_to_ptr.vmem [resolvable:$true] %s241
      %244 = dma.vmem_to_hbm [thread:$0]  %s242, 32, %s6, [#allocation11]
    $region41: #{tpu_custom_call.1} parent=1 // pred_fallthru
      _
    // Predicated region
    $region42: #{tpu_custom_call.1} parent=1 // pred_check
      _
    $region43: #{tpu_custom_call.1} parent=1 // pred_check_branch
      %246 = sbr.rel (0) target = $region45
    $region44: #{tpu_custom_call.1} parent=1 // pred_region
      %s248 = ssub.s32 32, 32
      %249 = vsyncadd [#allocation14], %s248
      %s251 = sshll.u32 [#allocation13], 4
      %s252 = int_to_ptr.vmem [resolvable:$true] %s251
      %254 = dma.vmem_to_hbm [thread:$0]  %s252, 32, %s7, [#allocation14]
    $region45: #{tpu_custom_call.1} parent=1 // pred_fallthru
      _
    // Predicated region
    $region46: #{tpu_custom_call.1} parent=1 // pred_check
      _
    $region47: #{tpu_custom_call.1} parent=1 // pred_check_branch
      %256 = sbr.rel (0) target = $region49
    $region48: #{tpu_custom_call.1} parent=1 // pred_region
      %s258 = ssub.s32 32, 32
      %259 = vsyncadd [#allocation14], %s258
      %s261 = sshll.u32 [#allocation15], 4
      %s262 = int_to_ptr.vmem [resolvable:$true] %s261
      %264 = dma.vmem_to_hbm [thread:$0]  %s262, 32, %s8, [#allocation14]
    $region49: #{tpu_custom_call.1} parent=1 // pred_fallthru
      _
    // Predicated region
    $region50: #{tpu_custom_call.1} parent=1 // pred_check
      _
    $region51: #{tpu_custom_call.1} parent=1 // pred_check_branch
      %266 = sbr.rel (0) target = $region53
    $region52: #{tpu_custom_call.1} parent=1 // pred_region
      %s268 = ssub.s32 32, 32
      %269 = vsyncadd [#allocation17], %s268
      %s271 = sshll.u32 [#allocation16], 4
      %s272 = int_to_ptr.vmem [resolvable:$true] %s271
      %274 = dma.vmem_to_hbm [thread:$0]  %s272, 32, %s9, [#allocation17]
    $region53: #{tpu_custom_call.1} parent=1 // pred_fallthru
      _
    // Predicated region
    $region54: #{tpu_custom_call.1} parent=1 // pred_check
      _
    $region55: #{tpu_custom_call.1} parent=1 // pred_check_branch
      %276 = sbr.rel (0) target = $region57
    $region56: #{tpu_custom_call.1} parent=1 // pred_region
      %s278 = ssub.s32 32, 32
      %279 = vsyncadd [#allocation17], %s278
      %s281 = sshll.u32 [#allocation18], 4
      %s282 = int_to_ptr.vmem [resolvable:$true] %s281
      %284 = dma.vmem_to_hbm [thread:$0]  %s282, 32, %s10, [#allocation17]
    $region57: #{tpu_custom_call.1} parent=1 // pred_fallthru
      _
    // Predicated region
    $region58: #{tpu_custom_call.1} parent=1 // pred_check
      _
    $region59: #{tpu_custom_call.1} parent=1 // pred_check_branch
      %286 = sbr.rel (0) target = $region61
    $region60: #{tpu_custom_call.1} parent=1 // pred_region
      %s288 = ssub.s32 32, 32
      %289 = vsyncadd [#allocation20], %s288
      %s291 = sshll.u32 [#allocation19], 4
      %s292 = int_to_ptr.vmem [resolvable:$true] %s291
      %294 = dma.vmem_to_hbm [thread:$0]  %s292, 32, %s11, [#allocation20]
    $region61: #{tpu_custom_call.1} parent=1 // pred_fallthru
      _
    // Predicated region
    $region62: #{tpu_custom_call.1} parent=1 // pred_check
      _
    $region63: #{tpu_custom_call.1} parent=1 // pred_check_branch
      %296 = sbr.rel (0) target = $region65
    $region64: #{tpu_custom_call.1} parent=1 // pred_region
      %s298 = ssub.s32 32, 32
      %299 = vsyncadd [#allocation20], %s298
      %s301 = sshll.u32 [#allocation21], 4
      %s302 = int_to_ptr.vmem [resolvable:$true] %s301
      %304 = dma.vmem_to_hbm [thread:$0]  %s302, 32, %s12, [#allocation20]
    $region65: #{tpu_custom_call.1} parent=1 // pred_fallthru
      _
    // Predicated region
    $region66: #{tpu_custom_call.1} parent=1 // pred_check
      _
    $region67: #{tpu_custom_call.1} parent=1 // pred_check_branch
      %306 = sbr.rel (0) target = $region69
    $region68: #{tpu_custom_call.1} parent=1 // pred_region
      %s308 = ssub.s32 32, 32
      %309 = vsyncadd [#allocation23], %s308
      %s311 = sshll.u32 [#allocation22], 4
      %s312 = int_to_ptr.vmem [resolvable:$true] %s311
      %314 = dma.vmem_to_hbm [thread:$0]  %s312, 32, %s13, [#allocation23]
    $region69: #{tpu_custom_call.1} parent=1 // pred_fallthru
      _
    // Predicated region
    $region70: #{tpu_custom_call.1} parent=1 // pred_check
      _
    $region71: #{tpu_custom_call.1} parent=1 // pred_check_branch
      %316 = sbr.rel (0) target = $region73
    $region72: #{tpu_custom_call.1} parent=1 // pred_region
      %317 = dma.done [#allocation4], 32
    $region73: #{tpu_custom_call.1} parent=1 // pred_fallthru
      _
    // Predicated region
    $region74: #{tpu_custom_call.1} parent=1 // pred_check
      _
    $region75: #{tpu_custom_call.1} parent=1 // pred_check_branch
      %319 = sbr.rel (0) target = $region77
    $region76: #{tpu_custom_call.1} parent=1 // pred_region
      %320 = dma.done [#allocation11], 32
    $region77: #{tpu_custom_call.1} parent=1 // pred_fallthru
      _
    // Predicated region
    $region78: #{tpu_custom_call.1} parent=1 // pred_check
      _
    $region79: #{tpu_custom_call.1} parent=1 // pred_check_branch
      %322 = sbr.rel (0) target = $region81
    $region80: #{tpu_custom_call.1} parent=1 // pred_region
      %323 = dma.done [#allocation11], 32
    $region81: #{tpu_custom_call.1} parent=1 // pred_fallthru
      _
    // Predicated region
    $region82: #{tpu_custom_call.1} parent=1 // pred_check
      _
    $region83: #{tpu_custom_call.1} parent=1 // pred_check_branch
      %325 = sbr.rel (0) target = $region85
    $region84: #{tpu_custom_call.1} parent=1 // pred_region
      %326 = dma.done [#allocation14], 32
    $region85: #{tpu_custom_call.1} parent=1 // pred_fallthru
      _
    // Predicated region
    $region86: #{tpu_custom_call.1} parent=1 // pred_check
      _
    $region87: #{tpu_custom_call.1} parent=1 // pred_check_branch
      %328 = sbr.rel (0) target = $region89
    $region88: #{tpu_custom_call.1} parent=1 // pred_region
      %329 = dma.done [#allocation14], 32
    $region89: #{tpu_custom_call.1} parent=1 // pred_fallthru
      _
    // Predicated region
    $region90: #{tpu_custom_call.1} parent=1 // pred_check
      _
    $region91: #{tpu_custom_call.1} parent=1 // pred_check_branch
      %331 = sbr.rel (0) target = $region93
    $region92: #{tpu_custom_call.1} parent=1 // pred_region
      %332 = dma.done [#allocation17], 32
    $region93: #{tpu_custom_call.1} parent=1 // pred_fallthru
      _
    // Predicated region
    $region94: #{tpu_custom_call.1} parent=1 // pred_check
      _
    $region95: #{tpu_custom_call.1} parent=1 // pred_check_branch
      %334 = sbr.rel (0) target = $region97
    $region96: #{tpu_custom_call.1} parent=1 // pred_region
      %335 = dma.done [#allocation17], 32
    $region97: #{tpu_custom_call.1} parent=1 // pred_fallthru
      _
    // Predicated region
    $region98: #{tpu_custom_call.1} parent=1 // pred_check
      _
    $region99: #{tpu_custom_call.1} parent=1 // pred_check_branch
      %337 = sbr.rel (0) target = $region101
    $region100: #{tpu_custom_call.1} parent=1 // pred_region
      %338 = dma.done [#allocation20], 32
    $region101: #{tpu_custom_call.1} parent=1 // pred_fallthru
      _
    // Predicated region
    $region102: #{tpu_custom_call.1} parent=1 // pred_check
      _
    $region103: #{tpu_custom_call.1} parent=1 // pred_check_branch
      %340 = sbr.rel (0) target = $region105
    $region104: #{tpu_custom_call.1} parent=1 // pred_region
      %341 = dma.done [#allocation20], 32
    $region105: #{tpu_custom_call.1} parent=1 // pred_fallthru
      _
    // Predicated region
    $region106: #{tpu_custom_call.1} parent=1 // pred_check
      _
    $region107: #{tpu_custom_call.1} parent=1 // pred_check_branch
      %343 = sbr.rel (0) target = $region109
    $region108: #{tpu_custom_call.1} parent=1 // pred_region
      %344 = dma.done [#allocation23], 32
    $region109: #{tpu_custom_call.1} parent=1 // pred_fallthru
      _
    %345 = vsyncpa [#allocation3], 1
    %346 = vsyncpa [#allocation4], 1
    %347 = vsyncpa [#allocation11], 1
    %348 = vsyncpa [#allocation14], 1
    %349 = vsyncpa [#allocation17], 1
    %350 = vsyncpa [#allocation20], 1
    %351 = vsyncpa [#allocation23], 1
    %352 = vsyncpa [#allocation5], 1
    %353 = vsyncpa [#allocation6], 1

</llo_original>
